<compile_context>
chip_gen: v7x
topology: tpu7x:2x2x1
jax: 0.10.0
libtpu: 0.0.40
codegen_flags: <defaults>
</compile_context>

<pallas_src>
import jax
import jax.numpy as jnp
from jax.experimental import pallas as pl
from jax.experimental.pallas import tpu as pltpu


def _round_up(x, m):
    return ((x + m - 1) // m) * m


def _pick_bt(B, N, target_rows=256):
    """Largest divisor of B with bt*N <= target_rows, keeping >=2 grid steps
    (two v7x TensorCores) whenever B >= 2."""
    best = 1
    for bt in range(1, B + 1):
        if B % bt != 0:
            continue
        if bt > 1 and bt * N > target_rows:
            break
        if B >= 2 and B // bt < 2:
            continue
        best = bt
    return best


def embed_kernel(x_ref, w_ref, pos_ref, o_ref):
    # x_ref:   (Bt, N, Kp)  bf16 flattened patches
    # w_ref:   (Kp, Ep)     bf16 projection weight (resident across the grid)
    # pos_ref: (N, Ep)      f32  positional embedding with the conv bias folded in
    # o_ref:   (Bt, N, Ep)  f32
    bt, n, kp = x_ref.shape
    ep = w_ref.shape[1]
    x = x_ref[...].reshape(bt * n, kp)                     # merge batch into M dim
    y = jnp.dot(x, w_ref[...], preferred_element_type=jnp.float32)   # (bt*n, Ep) f32
    y = y.reshape(bt, n, ep) + pos_ref[...]                # f32 add, broadcasts over Bt
    o_ref[...] = y.astype(o_ref.dtype)
    # TODO(synk): dropout is identity here (p=0.0 / eval mode); no RNG mask applied.


def embed_layer_forward(x, conv_w, conv_b, pos_embedding, cls_token, patch_size):
    """x: (B, C, H, W) float32.  Returns (B, N+1, E) float32."""
    B, C, H, W = x.shape
    P = patch_size
    E = conv_w.shape[0]
    nh, nw = H // P, W // P
    N = nh * nw
    K = C * P * P

    # Lane-dense padding targets.
    Ep = _round_up(E, 128)
    Kp = _round_up(K, 128)

    # --- patch extraction (matches Conv2d(kernel=P, stride=P) semantics) ---
    # (B, C, nh, P, nw, P) -> (B, nh, nw, C, P, P) -> (B, N, K); flatten order
    # (C, ph, pw) matches the conv-weight reshape below.
    patches = x.reshape(B, C, nh, P, nw, P)
    patches = patches.transpose(0, 2, 4, 1, 3, 5).reshape(B, N, K)
    if Kp != K:
        patches = jnp.pad(patches, ((0, 0), (0, 0), (0, Kp - K)))
    patches = patches.astype(jnp.bfloat16)

    # Conv weight (E, C, P, P) -> (K, E), zero-pad to (Kp, Ep), bf16 operands.
    w_lin = conv_w.reshape(E, K).T
    w_lin = jnp.pad(w_lin, ((0, Kp - K), (0, Ep - E))).astype(jnp.bfloat16)

    # Fold the conv bias into the positional embedding (stays f32), pad E.
    pos_b = pos_embedding.reshape(N, E) + conv_b.reshape(1, E)
    pos_b = jnp.pad(pos_b, ((0, 0), (0, Ep - E))).astype(jnp.float32)

    # Batch images per grid step.
    bt = _pick_bt(B, N)
    grid = (B // bt,)

    cost = pl.CostEstimate(
        flops=2 * B * N * Kp * Ep,
        transcendentals=0,
        bytes_accessed=int(patches.size * 2 + w_lin.size * 2
                           + pos_b.size * 4 + B * N * Ep * 4),
    )

    # VMEM budget: double-buffered patch/output tiles + resident weight/pos.
    vmem_bytes = (
        2 * bt * N * Kp * 2      # patches bf16, 2 bufs
        + 2 * Kp * Ep * 2        # weight bf16 (constant index -> DMA'd once)
        + 2 * N * Ep * 4         # pos f32
        + 2 * bt * N * Ep * 4    # output f32, 2 bufs
    )
    vmem_limit = int(min(64 * 2**20, max(4 * vmem_bytes, 16 * 2**20)))

    out = pl.pallas_call(
        embed_kernel,
        out_shape=jax.ShapeDtypeStruct((B, N, Ep), jnp.float32),
        grid_spec=pltpu.PrefetchScalarGridSpec(
            num_scalar_prefetch=0,
            grid=grid,
            in_specs=[
                pl.BlockSpec((bt, N, Kp), lambda b: (b, 0, 0)),   # patches per step
                pl.BlockSpec((Kp, Ep), lambda b: (0, 0)),         # weight (resident)
                pl.BlockSpec((N, Ep), lambda b: (0, 0)),          # pos + bias (resident)
            ],
            out_specs=pl.BlockSpec((bt, N, Ep), lambda b: (b, 0, 0)),
        ),
        compiler_params=pltpu.CompilerParams(
            dimension_semantics=("parallel",),
            vmem_limit_bytes=vmem_limit,
            allow_input_fusion=[True, False, False],   # fuse patch transpose/pad/cast
        ),
        cost_estimate=cost,
    )(patches, w_lin, pos_b)

    out = out[:, :, :E]  # drop lane padding

    # Prepend the cls token in the wrapper (kernel output stays 8-sublane aligned).
    cls = jnp.broadcast_to(cls_token.reshape(1, 1, E), (B, 1, E)).astype(out.dtype)
    return jnp.concatenate([cls, out], axis=1)


def reference_forward(x, conv_w, conv_b, pos_embedding, cls_token, patch_size):
    """Plain-JAX reference reproducing the PyTorch forward exactly (f32)."""
    B = x.shape[0]
    E = conv_w.shape[0]
    y = jax.lax.conv_general_dilated(
        x, conv_w,
        window_strides=(patch_size, patch_size),
        padding="VALID",
        dimension_numbers=("NCHW", "OIHW", "NCHW"),
    ) + conv_b.reshape(1, E, 1, 1)
    y = y.reshape(B, E, -1)            # (B, E, N)
    y = jnp.transpose(y, (0, 2, 1))    # (B, N, E)
    y = y + pos_embedding              # (1, N, E) broadcast
    cls = jnp.broadcast_to(cls_token, (B, 1, E))
    return jnp.concatenate([cls, y], axis=1)


if __name__ == "__main__":
    # Small shapes consistent with the module: B=2, C=4, image=16, patch=4, E=32.
    B, C, IMG, P, E = 2, 4, 16, 4, 32
    N = (IMG // P) ** 2

    key = jax.random.PRNGKey(0)
    k_x, k_w, k_b, k_pos, k_cls = jax.random.split(key, 5)

    x = jax.random.normal(k_x, (B, C, IMG, IMG), dtype=jnp.float32)
    conv_w = jax.random.normal(k_w, (E, C, P, P), dtype=jnp.float32) * 0.05
    conv_b = jax.random.normal(k_b, (E,), dtype=jnp.float32) * 0.05
    # nn.Parameter zeros in __init__; use small deterministic values so the
    # add paths are actually exercised.
    pos_embedding = jax.random.normal(k_pos, (1, N, E), dtype=jnp.float32) * 0.02
    cls_token = jax.random.normal(k_cls, (1, 1, E), dtype=jnp.float32) * 0.02

    out = embed_layer_forward(x, conv_w, conv_b, pos_embedding, cls_token, P)
    out = jax.block_until_ready(out)

    ref = reference_forward(x, conv_w, conv_b, pos_embedding, cls_token, P)
    assert out.shape == (B, N + 1, E), out.shape
    # bf16 matmul operands with f32 accumulation -> small rounding vs f32 reference.
    assert jnp.allclose(out, ref, atol=2e-2, rtol=2e-2), float(jnp.abs(out - ref).max())

    print("KERNEL_OK")
</pallas_src>

<mosaic_0001>
module attributes {stable_mosaic.version = 11 : i64} {
  func.func @embed_kernel(%arg0: i32, %arg1: memref<1x16x128xbf16, #tpu.memory_space<vmem>>, %arg2: memref<128x128xbf16, #tpu.memory_space<vmem>>, %arg3: memref<16x128xf32, #tpu.memory_space<vmem>>, %arg4: memref<1x16x128xf32, #tpu.memory_space<vmem>>) attributes {dimension_semantics = [#tpu.dimension_semantics<parallel>], iteration_bounds = array<i64: 2>, scalar_prefetch = 0 : i64, scratch_operands = 0 : i64, tpu.core_type = #tpu.core_type<tc>, window_params = [{transform_indices = @transform_0, window_bounds = array<i64: 1, 16, 128>}, {pipeline_mode = #tpu.pipeline_mode<synchronous>, transform_indices = @transform_1, window_bounds = array<i64: 128, 128>}, {pipeline_mode = #tpu.pipeline_mode<synchronous>, transform_indices = @transform_2, window_bounds = array<i64: 16, 128>}, {transform_indices = @transform_3, window_bounds = array<i64: 1, 16, 128>}]} {
    %c0 = arith.constant 0 : index
    %c0_0 = arith.constant 0 : index
    %c0_1 = arith.constant 0 : index
    %0 = vector.load %arg1[%c0, %c0_0, %c0_1] : memref<1x16x128xbf16, #tpu.memory_space<vmem>>, vector<1x16x128xbf16>
    %1 = vector.shape_cast %0 : vector<1x16x128xbf16> to vector<16x128xbf16>
    %c0_2 = arith.constant 0 : index
    %c0_3 = arith.constant 0 : index
    %2 = vector.load %arg2[%c0_2, %c0_3] : memref<128x128xbf16, #tpu.memory_space<vmem>>, vector<128x128xbf16>
    %cst = arith.constant dense<0.000000e+00> : vector<16x128xf32>
    %3 = tpu.matmul %1, %2, %cst {dimension_numbers = #tpu.dot_dimension_numbers<[1], [0], [0], [1], [0, 0, 1, 1], [], []>} : vector<16x128xbf16>, vector<128x128xbf16>, vector<16x128xf32> -> vector<16x128xf32>
    %4 = vector.shape_cast %3 : vector<16x128xf32> to vector<1x16x128xf32>
    %c0_4 = arith.constant 0 : index
    %c0_5 = arith.constant 0 : index
    %5 = vector.load %arg3[%c0_4, %c0_5] : memref<16x128xf32, #tpu.memory_space<vmem>>, vector<16x128xf32>
    %6 = vector.shape_cast %5 : vector<16x128xf32> to vector<1x16x128xf32>
    %7 = arith.addf %4, %6 : vector<1x16x128xf32>
    %c0_6 = arith.constant 0 : index
    %c0_7 = arith.constant 0 : index
    %c0_8 = arith.constant 0 : index
    %8 = vector.load %arg4[%c0_6, %c0_7, %c0_8] : memref<1x16x128xf32, #tpu.memory_space<vmem>>, vector<1x16x128xf32>
    tpu.vector_store %arg4[%c0_6, %c0_7, %c0_8], %7 {strides = array<i32>} : memref<1x16x128xf32, #tpu.memory_space<vmem>>, vector<1x16x128xf32>,
    return
  }
  func.func @transform_0(%arg0: i32) -> (i32, i32, i32) {
    %c0_i32 = arith.constant 0 : i32
    %c0_i32_0 = arith.constant 0 : i32
    %c0_i32_1 = arith.constant 0 : i32
    return %arg0, %c0_i32, %c0_i32_0 : i32, i32, i32
  }
  func.func @transform_1(%arg0: i32) -> (i32, i32) {
    %c0_i32 = arith.constant 0 : i32
    %c0_i32_0 = arith.constant 0 : i32
    %c0_i32_1 = arith.constant 0 : i32
    return %c0_i32, %c0_i32_0 : i32, i32
  }
  func.func @transform_2(%arg0: i32) -> (i32, i32) {
    %c0_i32 = arith.constant 0 : i32
    %c0_i32_0 = arith.constant 0 : i32
    %c0_i32_1 = arith.constant 0 : i32
    return %c0_i32, %c0_i32_0 : i32, i32
  }
  func.func @transform_3(%arg0: i32) -> (i32, i32, i32) {
    %c0_i32 = arith.constant 0 : i32
    %c0_i32_0 = arith.constant 0 : i32
    %c0_i32_1 = arith.constant 0 : i32
    return %arg0, %c0_i32, %c0_i32_0 : i32, i32, i32
  }
}

</mosaic_0001>

<llo_original>
// kernel: tpu_custom_call.1
$region0: #{tpu_custom_call.1}
  #allocation0 [shape = 'u32[]', space=smem, size = 0x4, offset = 0x4, fixed_abs, tag = 'smem constant byte address 0x4 - core index']
  #allocation1 [shape = 'u32[144,128]{1,0:T(1,128)}', space=vmem, size = 0x12000, scoped, tag = 'internal scratch']
  %s0 = inlined_call_operand.hbm [shape: bf16[2,16,128], index: 0, kind: input, shape index: {}]
  %s1 = inlined_call_operand.hbm [shape: bf16[128,128], index: 1, kind: input, shape index: {}]
  %s2 = inlined_call_operand.hbm [shape: f32[16,128], index: 2, kind: input, shape index: {}]
  %s3 = inlined_call_operand.hbm [shape: f32[2,16,128], index: 3, kind: output, shape index: {}]
  %s4 = sld [smem:[#allocation0]]
  $region57: #{tpu_custom_call.1} parent=0
    _
  %s6 = ssub.s32 1, %s4
  %s7 = scalar_select 0, %s6, %s4
  $region1: #{tpu_custom_call.1} parent=0
    #allocation2 [shape = 'u8[8192]{0}', space=vmem, size = 0x2000, scoped, tag = 'input window, operand 0']
    #allocation3 [shape = 's32[2]{0}', space=sflag, size = 0x8, scoped, tag = 'scoped memory for tpu_custom_call.1']
    #allocation4 [shape = 's32[2]{0}', space=sflag, size = 0x8, scoped, tag = 'scoped memory for tpu_custom_call.1']
    #allocation5 [shape = 'u8[32768]{0}', space=vmem, size = 0x8000, scoped, tag = 'input window, operand 1, single buffered']
    #allocation6 [shape = 's32[1]{0}', space=sflag, size = 0x4, scoped, tag = 'scoped memory for tpu_custom_call.1']
    #allocation7 [shape = 'u8[8192]{0}', space=vmem, size = 0x2000, scoped, tag = 'input window, operand 2, single buffered']
    #allocation8 [shape = 'u8[16384]{0}', space=vmem, size = 0x4000, scoped, tag = 'output window, operand 0']
    %8 = vsyncpa [#allocation3], 0
    %s9 = scalar_lea.sflag [#allocation3], 1
    %10 = vsyncpa %s9, 0
    %11 = vsyncpa [#allocation6], 0
    %12 = vsyncpa [#allocation4], 0
    %s13 = scalar_lea.sflag [#allocation4], 1
    %14 = vsyncpa %s13, 0
    loop: start=0, step=1, limit=4
    $region2: #{tpu_custom_call.1} parent=1 // loop_pre_header
      _
    $region3: #{tpu_custom_call.1} parent=1 // loop_header
      %s16 = sphi 0, %s20
      %p17 = scmp.ge.s32.totalorder %s16, 4
      %s26 = sphi 0, %s28
      %s29 = sphi 0, %s26
      %s30 = sphi 0, %s29
      %s46 = sphi 0, %s30
      %s50 = sphi 0, %s50
      %s52 = sphi 0, %s50
      %s53 = sphi 0, %s52
      %s67 = sphi 0, %s53
      %s71 = sphi 0, %s71
      %s73 = sphi 0, %s71
      %s74 = sphi 0, %s73
      %s88 = sphi 0, %s74
      %s94 = sphi 0, %s96
      %s97 = sphi 0, %s94
      %s98 = sphi 0, %s97
      %s114 = sphi 0, %s98
    $region4: #{tpu_custom_call.1} parent=1 // loop_header_branch
      %19 = sbr.rel (%p17) target = $region8
    $region5: #{tpu_custom_call.1} parent=1 // loop_body
      %s21 = ssub.s32 %s16, 1
      %s22 = ssub.s32 %s16, 2
      %s23 = sadd.s32 %s16, 1
      %s24 = ssub.s32 %s16, %s23
      %p25 = scmp.eq.s32.totalorder %s24, 0
      %s27 = sadd.s32 %s26, 1
      %s28 = scalar_select %p25, %s26, %s27
      %p31 = pneg %p25
      %p32 = scmp.eq.s32.totalorder %s16, 1
      %p33 = por %p31, %p32
      %p34 = scmp.ne.s32.totalorder %s26, %s29
      %p35 = scmp.eq.s32.totalorder %s16, 0
      %p36 = por %p34, %p35
      %p37 = scmp.ne.s32.totalorder %s26, %s29
      %p38 = scmp.eq.s32.totalorder %s21, 1
      %p39 = por %p37, %p38
      %p40 = scmp.ne.s32.totalorder %s29, %s30
      %p41 = scmp.eq.s32.totalorder %s21, 0
      %p42 = por %p40, %p41
      %p43 = scmp.ne.s32.totalorder %s29, %s30
      %p44 = scmp.eq.s32.totalorder %s22, 1
      %p45 = por %p43, %p44
      %p47 = scmp.ne.s32.totalorder %s30, %s46
      %p48 = scmp.eq.s32.totalorder %s22, 0
      %p49 = por %p47, %p48
      %s51 = sadd.s32 %s50, 1
      %p54 = scmp.eq.s32.totalorder %s16, 1
      %p55 = scmp.ne.s32.totalorder %s50, %s52
      %p56 = scmp.eq.s32.totalorder %s16, 0
      %p57 = por %p55, %p56
      %p58 = scmp.ne.s32.totalorder %s50, %s52
      %p59 = scmp.eq.s32.totalorder %s21, 1
      %p60 = por %p58, %p59
      %p61 = scmp.ne.s32.totalorder %s52, %s53
      %p62 = scmp.eq.s32.totalorder %s21, 0
      %p63 = por %p61, %p62
      %p64 = scmp.ne.s32.totalorder %s52, %s53
      %p65 = scmp.eq.s32.totalorder %s22, 1
      %p66 = por %p64, %p65
      %p68 = scmp.ne.s32.totalorder %s53, %s67
      %p69 = scmp.eq.s32.totalorder %s22, 0
      %p70 = por %p68, %p69
      %s72 = sadd.s32 %s71, 1
      %p75 = scmp.eq.s32.totalorder %s16, 1
      %p76 = scmp.ne.s32.totalorder %s71, %s73
      %p77 = scmp.eq.s32.totalorder %s16, 0
      %p78 = por %p76, %p77
      %p79 = scmp.ne.s32.totalorder %s71, %s73
      %p80 = scmp.eq.s32.totalorder %s21, 1
      %p81 = por %p79, %p80
      %p82 = scmp.ne.s32.totalorder %s73, %s74
      %p83 = scmp.eq.s32.totalorder %s21, 0
      %p84 = por %p82, %p83
      %p85 = scmp.ne.s32.totalorder %s73, %s74
      %p86 = scmp.eq.s32.totalorder %s22, 1
      %p87 = por %p85, %p86
      %p89 = scmp.ne.s32.totalorder %s74, %s88
      %p90 = scmp.eq.s32.totalorder %s22, 0
      %p91 = por %p89, %p90
      %s92 = ssub.s32 %s16, %s23
      %p93 = scmp.eq.s32.totalorder %s92, 0
      %s95 = sadd.s32 %s94, 1
      %s96 = scalar_select %p93, %s94, %s95
      %p99 = pneg %p93
      %p100 = scmp.eq.s32.totalorder %s16, 1
      %p101 = por %p99, %p100
      %p102 = scmp.ne.s32.totalorder %s94, %s97
      %p103 = scmp.eq.s32.totalorder %s16, 0
      %p104 = por %p102, %p103
      %p105 = scmp.ne.s32.totalorder %s94, %s97
      %p106 = scmp.eq.s32.totalorder %s21, 1
      %p107 = por %p105, %p106
      %p108 = scmp.ne.s32.totalorder %s97, %s98
      %p109 = scmp.eq.s32.totalorder %s21, 0
      %p110 = por %p108, %p109
      %p111 = scmp.ne.s32.totalorder %s97, %s98
      %p112 = scmp.eq.s32.totalorder %s22, 1
      %p113 = por %p111, %p112
      %p115 = scmp.ne.s32.totalorder %s98, %s114
      %p116 = scmp.eq.s32.totalorder %s22, 0
      %p117 = por %p115, %p116
      %p118 = scmp.le.s32.totalorder 1, %s16
      %p119 = scmp.lt.s32.totalorder %s16, 3
      %p120 = pnand %p118, %p119
      %p121 = pneg %p120
      // Predicated region
      $region9: #{tpu_custom_call.1} parent=5 // pred_check
        _
      $region10: #{tpu_custom_call.1} parent=5 // pred_check_branch
        %123 = sbr.rel (%p120) target = $region12
      $region11: #{tpu_custom_call.1} parent=5 // pred_region
        %s124 = ssub.s32 %s16, 1
        // Predicated region
        $region13: #{tpu_custom_call.1} parent=11 // pred_check
          %p125 = pneg %p63
        $region14: #{tpu_custom_call.1} parent=11 // pred_check_branch
          %127 = sbr.rel (%p125) target = $region16
        $region15: #{tpu_custom_call.1} parent=11 // pred_region
          %s129 = ssub.s32 1024, 1024
          %130 = vsyncadd [#allocation6], %s129
          %s131 = sshll.u32 [#allocation5], 4
          %s132 = int_to_ptr.vmem [resolvable:$true] %s131
          %137 = dma.hbm_to_vmem [thread:$0]  %s1, 1024, %s132, [#allocation6], 64, 64, 4
        $region16: #{tpu_custom_call.1} parent=11 // pred_fallthru
          _
        // Predicated region
        $region17: #{tpu_custom_call.1} parent=11 // pred_check
          %p138 = pneg %p84
        $region18: #{tpu_custom_call.1} parent=11 // pred_check_branch
          %140 = sbr.rel (%p138) target = $region20
        $region19: #{tpu_custom_call.1} parent=11 // pred_region
          %s142 = ssub.s32 256, 256
          %143 = vsyncadd [#allocation6], %s142
          %s144 = sshll.u32 [#allocation7], 4
          %s145 = int_to_ptr.vmem [resolvable:$true] %s144
          %150 = dma.hbm_to_vmem [thread:$0]  %s2, 256, %s145, [#allocation6], 128, 128, 8
        $region20: #{tpu_custom_call.1} parent=11 // pred_fallthru
          _
      $region12: #{tpu_custom_call.1} parent=5 // pred_fallthru
        _
      %p151 = scmp.lt.s32.totalorder %s16, 2
      // Predicated region
      $region21: #{tpu_custom_call.1} parent=5 // pred_check
        %p152 = pneg %p151
      $region22: #{tpu_custom_call.1} parent=5 // pred_check_branch
        %154 = sbr.rel (%p152) target = $region24
      $region23: #{tpu_custom_call.1} parent=5 // pred_region
        // Predicated region
        $region25: #{tpu_custom_call.1} parent=23 // pred_check
          %p155 = pneg %p36
        $region26: #{tpu_custom_call.1} parent=23 // pred_check_branch
          %157 = sbr.rel (%p155) target = $region28
        $region27: #{tpu_custom_call.1} parent=23 // pred_region
          %s158 = sand.u32 %s26, 1
          %s159 = scalar_lea.sflag [#allocation3], %s158
          %s160 = sand.u32 %s26, 1
          %s161 = smul.addr %s160, 8
          %s162 = scalar_lea.vmem [#allocation2], %s161
          %s164 = ssub.s32 128, 128
          %165 = vsyncadd %s159, %s164
          %s166 = smul.addr %s16, 2
          %s167 = smul.addr %s166, 64
          %s168 = scalar_lea.hbm %s0, %s167
          %s169 = sshll.u32 %s162, 4
          %s170 = int_to_ptr.vmem [resolvable:$true] %s169
          %175 = dma.hbm_to_vmem [thread:$0]  %s168, 128, %s170, %s159, 64, 64, 4
        $region28: #{tpu_custom_call.1} parent=23 // pred_fallthru
          _
      $region24: #{tpu_custom_call.1} parent=5 // pred_fallthru
        _
      %p176 = scmp.le.s32.totalorder 1, %s16
      %p177 = scmp.lt.s32.totalorder %s16, 3
      %p178 = pnand %p176, %p177
      %p179 = pneg %p178
      // Predicated region
      $region29: #{tpu_custom_call.1} parent=5 // pred_check
        _
      $region30: #{tpu_custom_call.1} parent=5 // pred_check_branch
        %181 = sbr.rel (%p178) target = $region32
      $region31: #{tpu_custom_call.1} parent=5 // pred_region
        %s182 = ssub.s32 %s16, 1
        %s183 = sand.u32 %s29, 1
        %s184 = scalar_lea.sflag [#allocation3], %s183
        %s185 = sand.u32 %s29, 1
        %s186 = smul.addr %s185, 8
        %s187 = scalar_lea.vmem [#allocation2], %s186
        // Predicated region
        $region33: #{tpu_custom_call.1} parent=31 // pred_check
          %p188 = pneg %p42
        $region34: #{tpu_custom_call.1} parent=31 // pred_check_branch
          %190 = sbr.rel (%p188) target = $region36
        $region35: #{tpu_custom_call.1} parent=31 // pred_region
          %191 = dma.done %s184, 128
        $region36: #{tpu_custom_call.1} parent=31 // pred_fallthru
          _
        // Predicated region
        $region37: #{tpu_custom_call.1} parent=31 // pred_check
          %p192 = pneg %p63
        $region38: #{tpu_custom_call.1} parent=31 // pred_check_branch
          %194 = sbr.rel (%p192) target = $region40
        $region39: #{tpu_custom_call.1} parent=31 // pred_region
          %195 = dma.done [#allocation6], 1024
        $region40: #{tpu_custom_call.1} parent=31 // pred_fallthru
          _
        // Predicated region
        $region41: #{tpu_custom_call.1} parent=31 // pred_check
          %p196 = pneg %p84
        $region42: #{tpu_custom_call.1} parent=31 // pred_check_branch
          %198 = sbr.rel (%p196) target = $region44
        $region43: #{tpu_custom_call.1} parent=31 // pred_region
          %199 = dma.done [#allocation6], 256
        $region44: #{tpu_custom_call.1} parent=31 // pred_fallthru
          _
        %s200 = sand.u32 %s29, 1
        %s201 = scalar_lea.sflag [#allocation3], %s200
        %s202 = sand.u32 %s29, 1
        %s203 = smul.addr %s202, 8
        %s204 = scalar_lea.vmem [#allocation2], %s203
        %p205 = pneg %p42
        %p206 = pneg %p39
        %p207 = pneg %p63
        %p208 = pneg %p60
        %p209 = pneg %p84
        %p210 = pneg %p81
        %p211 = pneg %p110
        %p212 = pneg %p107
        %s213 = sand.u32 %s97, 1
        %s214 = scalar_lea.sflag [#allocation4], %s213
        %s215 = sand.u32 %s97, 1
        %s216 = smul.addr %s215, 16
        %s217 = scalar_lea.vmem [#allocation8], %s216
        %v219 = vld [vmem:[%s187] sm:$0xf]
        %v220 = vld [vmem:[%s187 + $0x4] sm:$0xf]
        %v221 = vld [vmem:[#allocation5] sm:$0xf]
        %v222 = vld [vmem:[#allocation5 + $0x4] sm:$0xf]
        %v223 = vld [vmem:[#allocation5 + $0x8] sm:$0xf]
        %v224 = vld [vmem:[#allocation5 + $0xc] sm:$0xf]
        %v225 = vld [vmem:[#allocation5 + $0x10] sm:$0xf]
        %v226 = vld [vmem:[#allocation5 + $0x14] sm:$0xf]
        %v227 = vld [vmem:[#allocation5 + $0x18] sm:$0xf]
        %v228 = vld [vmem:[#allocation5 + $0x1c] sm:$0xf]
        %v229 = vld [vmem:[#allocation5 + $0x20] sm:$0xf]
        %v230 = vld [vmem:[#allocation5 + $0x24] sm:$0xf]
        %v231 = vld [vmem:[#allocation5 + $0x28] sm:$0xf]
        %v232 = vld [vmem:[#allocation5 + $0x2c] sm:$0xf]
        %v233 = vld [vmem:[#allocation5 + $0x30] sm:$0xf]
        %v234 = vld [vmem:[#allocation5 + $0x34] sm:$0xf]
        %v235 = vld [vmem:[#allocation5 + $0x38] sm:$0xf]
        %v236 = vld [vmem:[#allocation5 + $0x3c] sm:$0xf]
        %v239 = vunpack.c.l.b16 %v219
        %v240 = vunpack.c.l.b16 %v220
        %v241 = vpack.c.b16 %v240, %v239
        %v259 = vunpack.c.l.b16 %v221
        %v260 = vunpack.c.l.b16 %v222
        %v261 = vunpack.c.l.b16 %v223
        %v262 = vunpack.c.l.b16 %v224
        %v263 = vunpack.c.l.b16 %v225
        %v264 = vunpack.c.l.b16 %v226
        %v265 = vunpack.c.l.b16 %v227
        %v266 = vunpack.c.l.b16 %v228
        %v267 = vunpack.c.l.b16 %v229
        %v268 = vunpack.c.l.b16 %v230
        %v269 = vunpack.c.l.b16 %v231
        %v270 = vunpack.c.l.b16 %v232
        %v271 = vunpack.c.l.b16 %v233
        %v272 = vunpack.c.l.b16 %v234
        %v273 = vunpack.c.l.b16 %v235
        %v274 = vunpack.c.l.b16 %v236
        %v275 = vpack.c.b16 %v260, %v259
        %v276 = vpack.c.b16 %v262, %v261
        %v277 = vpack.c.b16 %v264, %v263
        %v278 = vpack.c.b16 %v266, %v265
        %v279 = vpack.c.b16 %v268, %v267
        %v280 = vpack.c.b16 %v270, %v269
        %v281 = vpack.c.b16 %v272, %v271
        %v282 = vpack.c.b16 %v274, %v273
        %291 = vmatprep.subr.bf16.mxu0 0
        %292 = vmatpush1.bf16.msra.mxu0 %v275
        %293 = vmatprep.subr.bf16.mxu0 0
        %294 = vmatpush1.bf16.msra.mxu0 %v276
        %295 = vmatprep.subr.bf16.mxu0 0
        %296 = vmatpush1.bf16.msra.mxu0 %v277
        %297 = vmatprep.subr.bf16.mxu0 0
        %298 = vmatpush1.bf16.msra.mxu0 %v278
        %299 = vmatprep.subr.bf16.mxu0 0
        %300 = vmatpush1.bf16.msra.mxu0 %v279
        %301 = vmatprep.subr.bf16.mxu0 0
        %302 = vmatpush1.bf16.msra.mxu0 %v280
        %303 = vmatprep.subr.bf16.mxu0 0
        %304 = vmatpush1.bf16.msra.mxu0 %v281
        %305 = vmatprep.subr.bf16.mxu0 0
        %306 = vmatpush1.bf16.msra.mxu0 %v282
        %307 = vmatprep.subr.bf16.mxu0 0
        %308 = vmatpush1.bf16.msra.mxu0 0
        %309 = vmatprep.subr.bf16.mxu0 0
        %310 = vmatpush1.bf16.msra.mxu0 0
        %311 = vmatprep.subr.bf16.mxu0 0
        %312 = vmatpush1.bf16.msra.mxu0 0
        %313 = vmatprep.subr.bf16.mxu0 0
        %314 = vmatpush1.bf16.msra.mxu0 0
        %315 = vmatprep.subr.bf16.mxu0 0
        %316 = vmatpush1.bf16.msra.mxu0 0
        %317 = vmatprep.subr.bf16.mxu0 0
        %318 = vmatpush1.bf16.msra.mxu0 0
        %319 = vmatprep.subr.bf16.mxu0 0
        %320 = vmatpush1.bf16.msra.mxu0 0
        %321 = vmatprep.subr.bf16.mxu0 0
        %322 = vmatpush1.bf16.msra.mxu0 0
        %323 = vmatprep.mubr.bf16.mxu0 0
        %324 = vmatmul.mubr.bf16.gmra.mrb[0].mxu0 %v241
        %v325 = vpop.f32.mrb[0].mxu0
        %v326 = vadd.f32 0.0, %v325
        %v327 = vpop.f32.mrb[0].mxu0
        %v328 = vpop.f32.mrb[0].mxu0
        %v329 = vadd.f32 0.0, %v328
        %v330 = vpop.f32.mrb[0].mxu0
        %331 = vdwg.mxu0
        %v332 = vld [vmem:[#allocation7] sm:$0xff]
        %v333 = vld [vmem:[#allocation7 + $0x8] sm:$0xff]
        %v334 = vadd.f32 %v326, %v332
        %v335 = vadd.f32 %v329, %v333
        %336 = vst [vmem:[%s217] sm:$0xff] %v334
        %337 = vst [vmem:[%s217 + $0x8] sm:$0xff] %v335
        %s338 = sand.u32 %s97, 1
        %s339 = scalar_lea.sflag [#allocation4], %s338
        %s340 = sand.u32 %s97, 1
        %s341 = smul.addr %s340, 16
        %s342 = scalar_lea.vmem [#allocation8], %s341
        // Predicated region
        $region45: #{tpu_custom_call.1} parent=31 // pred_check
          %p343 = pneg %p107
        $region46: #{tpu_custom_call.1} parent=31 // pred_check_branch
          %345 = sbr.rel (%p343) target = $region48
        $region47: #{tpu_custom_call.1} parent=31 // pred_region
          %s347 = ssub.s32 256, 256
          %348 = vsyncadd %s339, %s347
          %s349 = smul.addr %s21, 2
          %s350 = smul.addr %s349, 128
          %s351 = scalar_lea.hbm %s3, %s350
          %s352 = sshll.u32 %s342, 4
          %s353 = int_to_ptr.vmem [resolvable:$true] %s352
          %358 = dma.vmem_to_hbm [thread:$0]  %s353, 256, %s351, %s339, 128, 128, 8
        $region48: #{tpu_custom_call.1} parent=31 // pred_fallthru
          _
      $region32: #{tpu_custom_call.1} parent=5 // pred_fallthru
        _
      %p359 = scmp.le.s32.totalorder 2, %s16
      // Predicated region
      $region49: #{tpu_custom_call.1} parent=5 // pred_check
        %p360 = pneg %p359
      $region50: #{tpu_custom_call.1} parent=5 // pred_check_branch
        %362 = sbr.rel (%p360) target = $region52
      $region51: #{tpu_custom_call.1} parent=5 // pred_region
        %s363 = ssub.s32 %s16, 2
        // Predicated region
        $region53: #{tpu_custom_call.1} parent=51 // pred_check
          %p364 = pneg %p113
        $region54: #{tpu_custom_call.1} parent=51 // pred_check_branch
          %366 = sbr.rel (%p364) target = $region56
        $region55: #{tpu_custom_call.1} parent=51 // pred_region
          %s367 = sand.u32 %s98, 1
          %s368 = scalar_lea.sflag [#allocation4], %s367
          %s369 = sand.u32 %s98, 1
          %s370 = smul.addr %s369, 16
          %s371 = scalar_lea.vmem [#allocation8], %s370
          %372 = dma.done %s368, 256
        $region56: #{tpu_custom_call.1} parent=51 // pred_fallthru
          _
      $region52: #{tpu_custom_call.1} parent=5 // pred_fallthru
        _
    $region6: #{tpu_custom_call.1} parent=1 // loop_footer
      %s20 = sadd.s32 1, %s16
    $region7: #{tpu_custom_call.1} parent=1 // loop_footer_branch
      %15 = sbr.rel target = $region3
    $region8: #{tpu_custom_call.1} parent=1 // loop_exit
      _
    %373 = vsyncpa [#allocation3], 1
    %s374 = scalar_lea.sflag [#allocation3], 1
    %375 = vsyncpa %s374, 1
    %376 = vsyncpa [#allocation6], 1
    %377 = vsyncpa [#allocation4], 1
    %s378 = scalar_lea.sflag [#allocation4], 1
    %379 = vsyncpa %s378, 1

</llo_original>
